<compile_context>
chip_gen: v5e
topology: v5e:2x2
jax: 0.10.0
libtpu: 0.0.40
codegen_flags: <defaults>
</compile_context>

<pallas_src>
import math

import jax
import jax.numpy as jnp
from jax.experimental import pallas as pl
from jax.experimental.pallas import tpu as pltpu


# ----------------------------------------------------------------------------
# Kernel: out_tile = x_tile * mask_tile   (mask broadcast along the lane axis)
# ----------------------------------------------------------------------------
def _droppath_kernel(m_ref, x_ref, o_ref):
    o_ref[...] = x_ref[...] * m_ref[...]


def _round_up(v, m):
    return (v + m - 1) // m * m


def _round_down(v, m):
    return (v // m) * m


def _sublane_align(itemsize):
    # f32 packs 8 rows per vreg, bf16 packs 16, int8/fp8 pack 32.
    return {4: 8, 2: 16, 1: 32}.get(itemsize, 8)


def _budget_and_vmem_limit():
    """Per-grid-step x-tile byte budget + scoped-VMEM limit by TPU generation."""
    kind = ""
    try:
        kind = jax.devices()[0].device_kind.lower()
    except Exception:
        pass
    if "v7" in kind:
        budget = 6 << 20      # ~3.2 TB/s HBM/TC: bigger tiles amortize step cost
    elif "v5" in kind:
        budget = 3 << 20      # ~0.8 TB/s HBM: 2-4 MiB already ~90% of roofline
    else:
        budget = 4 << 20      # v6e / default
    # x + out + lane-padded mask tiles, each double buffered, plus slack.
    vmem_limit = min(6 * budget + (8 << 20), 48 << 20)
    return budget, vmem_limit


def _flat_call(x2d, mask, budget, vmem_limit):
    """F % 128 == 0 path: fold features into rows -> dense (8,128) tiles whose
    size is set by a byte budget, independent of the batch size."""
    B, F = x2d.shape
    itemsize = jnp.dtype(x2d.dtype).itemsize
    R = F // 128
    N = B * R

    x3 = x2d.reshape(N, 128)                                   # free reshape
    mask_rows = jnp.repeat(mask.astype(x2d.dtype), R).reshape(N, 1)

    # Row block: budget-sized, multiple of 32 (sublane-dense for any dtype).
    rb = max(32, _round_down(budget // (128 * itemsize), 32))
    if rb >= N:
        # Whole input fits in one step; split in two so a megacore chip (v7x,
        # 2 TCs) can shard the parallel axis, unless the input is trivial.
        rb = _round_up(pl.cdiv(N, 2), 32) if N >= 64 else N
    grid = (pl.cdiv(N, rb),)

    cost = pl.CostEstimate(
        flops=N * 128,
        transcendentals=0,
        bytes_accessed=2 * N * 128 * itemsize + N * itemsize)

    out = pl.pallas_call(
        _droppath_kernel,
        out_shape=jax.ShapeDtypeStruct((N, 128), x2d.dtype),
        grid=grid,
        in_specs=[
            pl.BlockSpec((rb, 1), lambda i: (i, 0)),       # per-row mask
            pl.BlockSpec((rb, 128), lambda i: (i, 0)),     # x tile
        ],
        out_specs=pl.BlockSpec((rb, 128), lambda i: (i, 0)),
        compiler_params=pltpu.CompilerParams(
            dimension_semantics=("parallel",),
            vmem_limit_bytes=vmem_limit),
        cost_estimate=cost,
    )(mask_rows, x3)
    return out.reshape(B, F)


def _rect_call(x2d, mask, budget, vmem_limit):
    """General path (F not a multiple of 128): 2-D (batch, feature) tiling with
    lane-dense feature blocks and a cdiv grid (Pallas masks ragged tails)."""
    B, F = x2d.shape
    itemsize = jnp.dtype(x2d.dtype).itemsize
    align = _sublane_align(itemsize)
    mask2d = mask.astype(x2d.dtype).reshape(B, 1)

    # Lane-dense feature block first, then grow the batch block under budget.
    bb0 = B if B <= align else align
    fb = budget // (bb0 * itemsize)
    fb = F if fb >= F else max(128, _round_down(fb, 128))
    bb = budget // (fb * itemsize)
    bb = B if bb >= B else max(align, _round_down(bb, align))
    grid = (pl.cdiv(B, bb), pl.cdiv(F, fb))

    cost = pl.CostEstimate(
        flops=B * F,
        transcendentals=0,
        bytes_accessed=2 * B * F * itemsize + B * itemsize)

    out = pl.pallas_call(
        _droppath_kernel,
        out_shape=jax.ShapeDtypeStruct((B, F), x2d.dtype),
        grid=grid,
        in_specs=[
            pl.BlockSpec((bb, 1), lambda i, j: (i, 0)),
            pl.BlockSpec((bb, fb), lambda i, j: (i, j)),
        ],
        out_specs=pl.BlockSpec((bb, fb), lambda i, j: (i, j)),
        compiler_params=pltpu.CompilerParams(
            dimension_semantics=("parallel", "parallel"),
            vmem_limit_bytes=vmem_limit),
        cost_estimate=cost,
    )(mask2d, x2d)
    return out


def pallas_drop_path(x, mask):
    """y[b, ...] = mask[b] * x[b, ...]   (mask is a (B,) array of 0.0 / 1.0)."""
    B = x.shape[0]
    F = math.prod(x.shape[1:]) if x.ndim > 1 else 1
    x2d = x.reshape(B, F)
    budget, vmem_limit = _budget_and_vmem_limit()
    if F % 128 == 0:
        out2d = _flat_call(x2d, mask, budget, vmem_limit)
    else:
        out2d = _rect_call(x2d, mask, budget, vmem_limit)
    return out2d.reshape(x.shape)


# ----------------------------------------------------------------------------
# Module-level wrapper replicating DropPath.forward (no 1/keep_prob rescale,
# matching the reference module exactly).
# ----------------------------------------------------------------------------
def _make_mask(key, batch, prob, dtype):
    keep_prob = 1.0 - prob
    u = jax.random.uniform(key, (batch,), dtype=jnp.float32)
    return jnp.floor(u + keep_prob).astype(dtype)   # 1 w.p. keep_prob, else 0


_FAST_PATH_BYTES = 1 << 20   # below this, fixed pallas step/launch cost dominates


def drop_path(x, prob, key, training=True):
    assert 0.0 <= prob <= 1.0, "Probability should be in range 0 to 1."
    if not training or prob == 0.0:
        return x                                    # eval mode: identity
    mask = _make_mask(key, x.shape[0], prob, x.dtype)
    nbytes = math.prod(x.shape) * jnp.dtype(x.dtype).itemsize
    if nbytes < _FAST_PATH_BYTES:
        # Tiny-input fast path: a fused XLA multiply beats any kernel overhead.
        return (mask.reshape((-1,) + (1,) * (x.ndim - 1)) * x).astype(x.dtype)
    return pallas_drop_path(x, mask)


def _ref(x, mask):
    return (mask.reshape((-1,) + (1,) * (x.ndim - 1)) * x).astype(x.dtype)


if __name__ == "__main__":
    key = jax.random.PRNGKey(0)
    kx1, kx2, kx3, kx5, km1, km2, km3, km5 = jax.random.split(key, 8)

    # Case 1: small (B, C, H, W) typical of DropPath usage; folded path, 1 step.
    x1 = jax.random.normal(kx1, (2, 4, 16, 16), dtype=jnp.float32)
    m1 = _make_mask(km1, x1.shape[0], 0.5, x1.dtype)
    o1 = jax.block_until_ready(pallas_drop_path(x1, m1))
    assert o1.shape == x1.shape
    assert bool(jnp.array_equal(o1, _ref(x1, m1))), "mismatch (case 1)"

    # Case 2: folded path with a 2-step parallel grid (N=768 rows, rb=384).
    x2 = jax.random.normal(kx2, (8, 3, 32, 128), dtype=jnp.float32)
    m2 = _make_mask(km2, x2.shape[0], 0.3, x2.dtype)
    o2 = jax.block_until_ready(pallas_drop_path(x2, m2))
    assert bool(jnp.array_equal(o2, _ref(x2, m2))), "mismatch (case 2)"

    # Case 3: feature size not a multiple of 128 -> rectangular fallback path.
    x3 = jax.random.normal(kx3, (4, 3, 10, 10), dtype=jnp.float32)
    m3 = _make_mask(km3, x3.shape[0], 0.5, x3.dtype)
    o3 = jax.block_until_ready(pallas_drop_path(x3, m3))
    assert bool(jnp.array_equal(o3, _ref(x3, m3))), "mismatch (case 3)"

    # Case 4: ragged row-tile tail on the folded path (N=96 rows, rb=64).
    x5 = jax.random.normal(kx5, (3, 32, 128), dtype=jnp.float32)
    m5 = _make_mask(km5, x5.shape[0], 0.4, x5.dtype)
    o5 = jax.block_until_ready(pallas_drop_path(x5, m5))
    assert bool(jnp.array_equal(o5, _ref(x5, m5))), "mismatch (case 4)"

    # Eval mode is the identity, exactly as in the PyTorch module.
    o_eval = drop_path(x1, 0.5, km1, training=False)
    assert bool(jnp.array_equal(o_eval, x1)), "eval path must be identity"

    # Training-mode wrapper end-to-end (mask drawn inside drop_path).
    o_train = jax.block_until_ready(drop_path(x1, 0.5, km1, training=True))
    assert bool(jnp.array_equal(o_train, _ref(x1, m1))), "training wrapper mismatch"

    print("KERNEL_OK")
</pallas_src>

<mosaic_0001>
module attributes {stable_mosaic.version = 11 : i64} {
  func.func @_droppath_kernel(%arg0: i32, %arg1: memref<16x1xf32, #tpu.memory_space<vmem>>, %arg2: memref<16x128xf32, #tpu.memory_space<vmem>>, %arg3: memref<16x128xf32, #tpu.memory_space<vmem>>) attributes {dimension_semantics = [#tpu.dimension_semantics<parallel>], iteration_bounds = array<i64: 1>, scalar_prefetch = 0 : i64, scratch_operands = 0 : i64, tpu.core_type = #tpu.core_type<tc>, window_params = [{transform_indices = @transform_0, window_bounds = array<i64: 16, 1>}, {transform_indices = @transform_1, window_bounds = array<i64: 16, 128>}, {transform_indices = @transform_2, window_bounds = array<i64: 16, 128>}]} {
    %c0 = arith.constant 0 : index
    %c0_0 = arith.constant 0 : index
    %0 = vector.load %arg2[%c0, %c0_0] : memref<16x128xf32, #tpu.memory_space<vmem>>, vector<16x128xf32>
    %c0_1 = arith.constant 0 : index
    %c0_2 = arith.constant 0 : index
    %1 = vector.load %arg1[%c0_1, %c0_2] : memref<16x1xf32, #tpu.memory_space<vmem>>, vector<16x1xf32>
    %2 = vector.broadcast %1 : vector<16x1xf32> to vector<16x128xf32>
    %3 = arith.mulf %0, %2 : vector<16x128xf32>
    %c0_3 = arith.constant 0 : index
    %c0_4 = arith.constant 0 : index
    %4 = vector.load %arg3[%c0_3, %c0_4] : memref<16x128xf32, #tpu.memory_space<vmem>>, vector<16x128xf32>
    tpu.vector_store %arg3[%c0_3, %c0_4], %3 {strides = array<i32>} : memref<16x128xf32, #tpu.memory_space<vmem>>, vector<16x128xf32>,
    return
  }
  func.func @transform_0(%arg0: i32) -> (i32, i32) {
    %c0_i32 = arith.constant 0 : i32
    %c0_i32_0 = arith.constant 0 : i32
    return %arg0, %c0_i32 : i32, i32
  }
  func.func @transform_1(%arg0: i32) -> (i32, i32) {
    %c0_i32 = arith.constant 0 : i32
    %c0_i32_0 = arith.constant 0 : i32
    return %arg0, %c0_i32 : i32, i32
  }
  func.func @transform_2(%arg0: i32) -> (i32, i32) {
    %c0_i32 = arith.constant 0 : i32
    %c0_i32_0 = arith.constant 0 : i32
    return %arg0, %c0_i32 : i32, i32
  }
}

</mosaic_0001>

<llo_original>
// kernel: tpu_custom_call.1
$region0: #{tpu_custom_call.1}
  #allocation0 [shape = 'u32[]', space=smem, size = 0x4, offset = 0x4, fixed_abs, tag = 'smem constant byte address 0x4 - core index']
  #allocation1 [shape = 'u32[72,128]{1,0:T(1,128)}', space=vmem, size = 0x9000, scoped, tag = 'internal scratch']
  %s0 = inlined_call_operand.vmem [shape: f32[16,1], index: 0, kind: input, shape index: {}]
  %s1 = inlined_call_operand.vmem [shape: f32[16,128], index: 1, kind: input, shape index: {}]
  %s2 = inlined_call_operand.hbm [shape: f32[16,128], index: 2, kind: output, shape index: {}]
  %s3 = sld [smem:[#allocation0]]
  $region18: #{tpu_custom_call.1} parent=0
    _
  %s5 = ssub.s32 1, %s3
  %s6 = scalar_select 0, %s5, %s3
  $region1: #{tpu_custom_call.1} parent=0
    #allocation2 [shape = 'u8[8192]{0}', space=vmem, size = 0x2000, scoped, tag = 'output window, operand 0, single buffered']
    #allocation3 [shape = 's32[1]{0}', space=sflag, size = 0x4, scoped, tag = 'scoped memory for tpu_custom_call.1']
    %7 = vsyncpa [#allocation3], 0
    // Predicated region
    $region2: #{tpu_custom_call.1} parent=1 // pred_check
      _
    $region3: #{tpu_custom_call.1} parent=1 // pred_check_branch
      %9 = sbr.rel (0) target = $region5
    $region4: #{tpu_custom_call.1} parent=1 // pred_region
      _
    $region5: #{tpu_custom_call.1} parent=1 // pred_fallthru
      _
    // Predicated region
    $region6: #{tpu_custom_call.1} parent=1 // pred_check
      _
    $region7: #{tpu_custom_call.1} parent=1 // pred_check_branch
      %11 = sbr.rel (0) target = $region9
    $region8: #{tpu_custom_call.1} parent=1 // pred_region
      _
    $region9: #{tpu_custom_call.1} parent=1 // pred_fallthru
      _
    %v12 = vld [vmem:[%s1] sm:$0xff]
    %v13 = vld [vmem:[%s1 + $0x8] sm:$0xff]
    %v14 = vld [vmem:[%s0] sm:$0xff]
    %v15 = vld [vmem:[%s0 + $0x8] sm:$0xff]
    %17 = vset.pattern.permute.xlu0 0
    %18 = vperm.xlu0 %17, %v14
    %v19 = vpop.permute.xlu0 %18
    %22 = vset.pattern.permute.xlu0 0
    %23 = vperm.xlu0 %22, %v15
    %v24 = vpop.permute.xlu0 %23
    %v26 = vmul.f32 %v12, %v19
    %v27 = vmul.f32 %v13, %v24
    %28 = vst [vmem:[#allocation2] sm:$0xff] %v26
    %29 = vst [vmem:[#allocation2 + $0x8] sm:$0xff] %v27
    // Predicated region
    $region10: #{tpu_custom_call.1} parent=1 // pred_check
      _
    $region11: #{tpu_custom_call.1} parent=1 // pred_check_branch
      %31 = sbr.rel (0) target = $region13
    $region12: #{tpu_custom_call.1} parent=1 // pred_region
      %33 = vsyncadd [#allocation3], 0
      %s34 = sshll.u32 [#allocation2], 4
      %s35 = int_to_ptr.vmem [resolvable:$true] %s34
      %s36 = sshll.u32 %s2, 4
      %s37 = int_to_ptr.hbm [resolvable:$true] %s36
      %42 = dma.vmem_to_hbm [thread:$0]  %s35, 256, %s37, [#allocation3], 128, 128, 8
    $region13: #{tpu_custom_call.1} parent=1 // pred_fallthru
      _
    // Predicated region
    $region14: #{tpu_custom_call.1} parent=1 // pred_check
      _
    $region15: #{tpu_custom_call.1} parent=1 // pred_check_branch
      %44 = sbr.rel (0) target = $region17
    $region16: #{tpu_custom_call.1} parent=1 // pred_region
      %46 = dma.done [#allocation3], 256
    $region17: #{tpu_custom_call.1} parent=1 // pred_fallthru
      _
    %47 = vsyncpa [#allocation3], 1

</llo_original>
